<compile_context>
chip_gen: v6e
topology: v6e:2x2x1
jax: 0.10.0
libtpu: 0.0.40
codegen_flags: <defaults>
</compile_context>

<pallas_src>
import functools

import jax
import jax.numpy as jnp
from jax.experimental import pallas as pl
from jax.experimental.pallas import tpu as pltpu

NEG_SLOPE = 0.01  # nn.LeakyReLU() default negative_slope


def _vmem_capacity_bytes():
    """Physical VMEM per TensorCore; conservative 64 MiB fallback (v7x-sized)."""
    try:
        info = pltpu.get_tpu_info()
        for attr in ("vmem_capacity_bytes", "vmem_bytes", "vmem_size_bytes"):
            v = getattr(info, attr, None)
            if v:
                return int(v)
    except Exception:
        pass
    return 64 * 1024 * 1024


def _tensorcores_per_chip():
    """Best-effort TC count (2 on v7x, 1 on v5e/v6e); default 1 if unknown."""
    try:
        info = pltpu.get_tpu_info()
        for attr in ("num_cores", "core_count", "num_tensorcores", "tensorcore_count"):
            v = getattr(info, attr, None)
            if v:
                return int(v)
    except Exception:
        pass
    return 1


def _pick_budgets(tile_budget_bytes, vmem_limit_bytes):
    cap = _vmem_capacity_bytes()
    big = cap >= 96 * 1024 * 1024          # 128 MiB parts (v5e / v6e)
    if tile_budget_bytes is None:
        tile_budget_bytes = (8 if big else 6) * 1024 * 1024
    if vmem_limit_bytes is None:
        vmem_limit_bytes = (64 if big else 48) * 1024 * 1024
    return tile_budget_bytes, vmem_limit_bytes


def _pick_tiles(R, S, itemsize, budget):
    """(row, lane) tile for a row-major (R, S) slab.

    Lane tile: multiple of 128 (or the full S).  Row tile: multiple of 8 (or the
    full R when R < 8).  Total tile bytes stay within `budget`.
    """
    ts = max(128, (budget // (8 * itemsize)) // 128 * 128)
    if ts >= S:
        ts = S                              # full extent is always a legal block
    if R <= 8:
        tr = R
    else:
        tr = max(8, min(R, budget // (ts * itemsize)) // 8 * 8)
    return tr, ts


@functools.partial(jax.jit, static_argnames=("tile_budget_bytes", "vmem_limit_bytes"))
def channel_gate1(x, conv_w, *, tile_budget_bytes=None, vmem_limit_bytes=None):
    """ChannelGate1 forward.

    x:      (N, C, D, H, W)
    conv_w: Conv1d(1, 1, k=3, padding=1, bias=False) weight; shape (3,) or (1, 1, 3).
    returns (N, C, D, H, W): LeakyReLU(conv1d(mean_{DHW}(x))) broadcast over (D, H, W).
    """
    N, C, D, H, W = x.shape
    S = D * H * W
    R = N * C
    itemsize = jnp.dtype(x.dtype).itemsize

    budget, vmem_limit = _pick_budgets(tile_budget_bytes, vmem_limit_bytes)
    tr, ts = _pick_tiles(R, S, itemsize, budget)
    nr = pl.cdiv(R, tr)
    ns = pl.cdiv(S, ts)

    # Parallel split of the spatial reduction: free whenever ns is even (no duplicated
    # reads); for odd ns only enable it when the chip actually has 2 TensorCores.
    if ns >= 2 and (ns % 2 == 0 or _tensorcores_per_chip() >= 2):
        P = 2
    else:
        P = 1
    ns_p = pl.cdiv(ns, P)
    needs_mask = (S % ts != 0) or (ns % P != 0)

    x2 = x.reshape(R, S)  # contiguous-dim merge: free reshape

    # ---- Pass 1: per-row (= per (n, c)) spatial sums, f32 accumulation ------------
    def _sum_kernel(x_ref, out_ref):
        @pl.when(pl.program_id(2) == 0)
        def _():
            out_ref[...] = jnp.zeros_like(out_ref)

        xt = x_ref[...]
        if needs_mask:
            # Absolute (unclamped) lane offset of this tile; out-of-bounds lanes of the
            # tail tile (and fully-clamped duplicate tiles when ns % P != 0) are zeroed.
            s_blk = pl.program_id(1) * ns_p + pl.program_id(2)
            lane = jax.lax.broadcasted_iota(jnp.int32, xt.shape, 1)
            xt = jnp.where(s_blk * ts + lane < S, xt, jnp.zeros_like(xt))
        out_ref[...] += jnp.sum(xt, axis=-1, keepdims=True, dtype=jnp.float32)[None]

    partials = pl.pallas_call(
        _sum_kernel,
        out_shape=jax.ShapeDtypeStruct((P, R, 1), jnp.float32),
        grid_spec=pltpu.PrefetchScalarGridSpec(
            num_scalar_prefetch=0,
            grid=(nr, P, ns_p),
            in_specs=[pl.BlockSpec(
                (tr, ts),
                lambda r, p, s: (r, jnp.minimum(p * ns_p + s, ns - 1)))],
            out_specs=pl.BlockSpec((1, tr, 1), lambda r, p, s: (p, r, 0)),
        ),
        compiler_params=pltpu.CompilerParams(
            dimension_semantics=("parallel", "parallel", "arbitrary"),
            vmem_limit_bytes=vmem_limit,
        ),
    )(x2)

    # ---- O(N*C) XLA glue: mean, 3-tap conv along C, LeakyReLU, cast ----------------
    w = conv_w.reshape(-1).astype(jnp.float32)                     # accepts (3,) or (1,1,3)
    mean = partials.sum(axis=0)[:, 0].reshape(N, C) / jnp.float32(S)
    mp = jnp.pad(mean, ((0, 0), (1, 1)))                           # zero pad along C
    y = w[0] * mp[:, 0:C] + w[1] * mp[:, 1:C + 1] + w[2] * mp[:, 2:C + 2]
    y = jnp.where(y >= 0.0, y, NEG_SLOPE * y)                      # LeakyReLU(0.01)
    gate = y.astype(x.dtype).reshape(R, 1)                         # cast C values, not C*S

    # ---- Pass 2: lane-dense broadcast store of the per-row gate --------------------
    def _broadcast_kernel(g_ref, o_ref):
        o_ref[...] = jnp.broadcast_to(g_ref[...], o_ref.shape)

    out2 = pl.pallas_call(
        _broadcast_kernel,
        out_shape=jax.ShapeDtypeStruct((R, S), x.dtype),
        grid_spec=pltpu.PrefetchScalarGridSpec(
            num_scalar_prefetch=0,
            grid=(nr, ns),
            in_specs=[pl.BlockSpec((tr, 1), lambda r, s: (r, 0))],
            out_specs=pl.BlockSpec((tr, ts), lambda r, s: (r, s)),
        ),
        compiler_params=pltpu.CompilerParams(
            dimension_semantics=("parallel", "parallel"),
            vmem_limit_bytes=vmem_limit,
        ),
    )(gate)

    return out2.reshape(N, C, D, H, W)


def _reference(x, conv_w):
    """Pure-JAX reference of the PyTorch forward."""
    C = x.shape[1]
    w = conv_w.reshape(-1).astype(jnp.float32)
    mean = jnp.mean(x.astype(jnp.float32), axis=(2, 3, 4))          # (N, C)
    mp = jnp.pad(mean, ((0, 0), (1, 1)))
    y = w[0] * mp[:, 0:C] + w[1] * mp[:, 1:C + 1] + w[2] * mp[:, 2:C + 2]
    y = jnp.where(y >= 0, y, NEG_SLOPE * y).astype(x.dtype)
    return jnp.broadcast_to(y[:, :, None, None, None], x.shape)


if __name__ == "__main__":
    key = jax.random.PRNGKey(0)
    k_x, k_w = jax.random.split(key)
    # Deterministic synthetic Conv1d(1, 1, k=3, bias=False) weight, shape (3,)
    conv_w = jax.random.normal(k_w, (3,), dtype=jnp.float32) * 0.5

    cases = [
        # (shape, kwargs) — the tiny forced tile budgets exercise the multi-tile,
        # masked-tail (S not a multiple of 128) and split-reduction code paths.
        ((2, 4, 4, 8, 8), {}),                                   # single-block fast path
        ((2, 4, 3, 10, 10), {"tile_budget_bytes": 4096}),        # S=300 -> masked tail
        ((1, 4, 4, 8, 8), {"tile_budget_bytes": 4096}),          # even ns -> P=2 split
    ]
    for shape, kw in cases:
        x = jax.random.normal(k_x, shape, dtype=jnp.float32)
        out = jax.block_until_ready(channel_gate1(x, conv_w, **kw))
        ref = _reference(x, conv_w)
        assert out.shape == x.shape
        err = float(jnp.max(jnp.abs(out - ref)))
        assert err < 1e-5, (shape, err)

    print("KERNEL_OK")
</pallas_src>

<mosaic_0001>
module attributes {stable_mosaic.version = 11 : i64} {
  func.func @_sum_kernel(%arg0: i32, %arg1: i32, %arg2: i32, %arg3: memref<8x256xf32, #tpu.memory_space<vmem>>, %arg4: memref<1x8x1xf32, #tpu.memory_space<vmem>>) attributes {dimension_semantics = [#tpu.dimension_semantics<parallel>, #tpu.dimension_semantics<parallel>, #tpu.dimension_semantics<arbitrary>], iteration_bounds = array<i64: 1, 1, 1>, scalar_prefetch = 0 : i64, scratch_operands = 0 : i64, tpu.core_type = #tpu.core_type<tc>, window_params = [{transform_indices = @transform_0, window_bounds = array<i64: 8, 256>}, {transform_indices = @transform_1, window_bounds = array<i64: 1, 8, 1>}]} {
    %c0_i32 = arith.constant 0 : i32
    %0 = arith.cmpi eq, %arg2, %c0_i32 : i32
    %1 = arith.extui %0 : i1 to i32
    %c0_i32_0 = arith.constant 0 : i32
    %2 = arith.cmpi ne, %1, %c0_i32_0 : i32
    scf.if %2 {
      %cst_8 = arith.constant 0.000000e+00 : f32
      %10 = vector.broadcast %cst_8 : f32 to vector<1x8x1xf32>
      %c0_9 = arith.constant 0 : index
      %c0_10 = arith.constant 0 : index
      %c0_11 = arith.constant 0 : index
      %11 = vector.load %arg4[%c0_9, %c0_10, %c0_11] : memref<1x8x1xf32, #tpu.memory_space<vmem>>, vector<1x8x1xf32>
      tpu.vector_store %arg4[%c0_9, %c0_10, %c0_11], %10 {strides = array<i32>} : memref<1x8x1xf32, #tpu.memory_space<vmem>>, vector<1x8x1xf32>,
    } else {
    }
    %c0 = arith.constant 0 : index
    %c0_1 = arith.constant 0 : index
    %3 = vector.load %arg3[%c0, %c0_1] : memref<8x256xf32, #tpu.memory_space<vmem>>, vector<8x256xf32>
    %c0_2 = arith.constant 0 : index
    %c0_3 = arith.constant 0 : index
    %c0_4 = arith.constant 0 : index
    %4 = vector.load %arg4[%c0_2, %c0_3, %c0_4] : memref<1x8x1xf32, #tpu.memory_space<vmem>>, vector<1x8x1xf32>
    %cst = arith.constant dense<0.000000e+00> : vector<8xf32>
    %5 = vector.multi_reduction <add>, %3, %cst [1] : vector<8x256xf32> to vector<8xf32>
    %6 = vector.shape_cast %5 : vector<8xf32> to vector<8x1xf32>
    %7 = vector.shape_cast %6 : vector<8x1xf32> to vector<1x8x1xf32>
    %8 = arith.addf %4, %7 : vector<1x8x1xf32>
    %c0_5 = arith.constant 0 : index
    %c0_6 = arith.constant 0 : index
    %c0_7 = arith.constant 0 : index
    %9 = vector.load %arg4[%c0_5, %c0_6, %c0_7] : memref<1x8x1xf32, #tpu.memory_space<vmem>>, vector<1x8x1xf32>
    tpu.vector_store %arg4[%c0_5, %c0_6, %c0_7], %8 {strides = array<i32>} : memref<1x8x1xf32, #tpu.memory_space<vmem>>, vector<1x8x1xf32>,
    return
  }
  func.func @transform_0(%arg0: i32, %arg1: i32, %arg2: i32) -> (i32, i32) {
    %c1_i32 = arith.constant 1 : i32
    %0 = arith.muli %arg1, %c1_i32 : i32
    %1 = arith.addi %0, %arg2 : i32
    %c0_i32 = arith.constant 0 : i32
    %2 = arith.minsi %1, %c0_i32 : i32
    %c0_i32_0 = arith.constant 0 : i32
    return %arg0, %2 : i32, i32
  }
  func.func @transform_1(%arg0: i32, %arg1: i32, %arg2: i32) -> (i32, i32, i32) {
    %c0_i32 = arith.constant 0 : i32
    %c0_i32_0 = arith.constant 0 : i32
    return %arg1, %arg0, %c0_i32 : i32, i32, i32
  }
}

module attributes {stable_mosaic.version = 11 : i64} {
  func.func @_broadcast_kernel(%arg0: i32, %arg1: i32, %arg2: memref<8x1xf32, #tpu.memory_space<vmem>>, %arg3: memref<8x256xf32, #tpu.memory_space<vmem>>) attributes {dimension_semantics = [#tpu.dimension_semantics<parallel>, #tpu.dimension_semantics<parallel>], iteration_bounds = array<i64: 1, 1>, scalar_prefetch = 0 : i64, scratch_operands = 0 : i64, tpu.core_type = #tpu.core_type<tc>, window_params = [{transform_indices = @transform_0, window_bounds = array<i64: 8, 1>}, {transform_indices = @transform_1, window_bounds = array<i64: 8, 256>}]} {
    %c0 = arith.constant 0 : index
    %c0_0 = arith.constant 0 : index
    %0 = vector.load %arg2[%c0, %c0_0] : memref<8x1xf32, #tpu.memory_space<vmem>>, vector<8x1xf32>
    %1 = vector.shape_cast %0 : vector<8x1xf32> to vector<8x1xf32>
    %2 = vector.broadcast %1 : vector<8x1xf32> to vector<8x256xf32>
    %c0_1 = arith.constant 0 : index
    %c0_2 = arith.constant 0 : index
    %3 = vector.load %arg3[%c0_1, %c0_2] : memref<8x256xf32, #tpu.memory_space<vmem>>, vector<8x256xf32>
    tpu.vector_store %arg3[%c0_1, %c0_2], %2 {strides = array<i32>} : memref<8x256xf32, #tpu.memory_space<vmem>>, vector<8x256xf32>,
    return
  }
  func.func @transform_0(%arg0: i32, %arg1: i32) -> (i32, i32) {
    %c0_i32 = arith.constant 0 : i32
    %c0_i32_0 = arith.constant 0 : i32
    return %arg0, %c0_i32 : i32, i32
  }
  func.func @transform_1(%arg0: i32, %arg1: i32) -> (i32, i32) {
    %c0_i32 = arith.constant 0 : i32
    return %arg0, %arg1 : i32, i32
  }
}

</mosaic_0001>

<llo_original>
// kernel: channel_gate1.2
$region0: #{channel_gate1.2}
  #allocation0 [shape = 'u32[]', space=smem, size = 0x4, offset = 0x4, fixed_abs, tag = 'smem constant byte address 0x4 - core index']
  #allocation1 [shape = 'u32[144,128]{1,0:T(1,128)}', space=vmem, size = 0x12000, scoped, tag = 'internal scratch']
  %s0 = inlined_call_operand.vmem [shape: f32[8,256], index: 0, kind: input, shape index: {}]
  %s1 = inlined_call_operand.vmem [shape: f32[1,8,1], index: 1, kind: output, shape index: {}]
  %s2 = sld [smem:[#allocation0]]
  $region18: #{channel_gate1.2} parent=0
    _
  %s4 = ssub.s32 1, %s2
  %s5 = scalar_select 0, %s4, %s2
  // Predicated region
  $region2: #{channel_gate1.2} parent=0 // pred_check
    _
  $region3: #{channel_gate1.2} parent=0 // pred_check_branch
    %7 = sbr.rel (0) target = $region5
  $region4: #{channel_gate1.2} parent=0 // pred_region
    %s8 = sadd.s32 0, 0
    %p9 = scmp.lt.s32.totalorder %s8, 0
    %s10 = scalar_select %p9, %s8, 0
    %s11 = smul.u32 2, %s10
    %p12 = scmp.lt.s32.totalorder %s11, 1
    %s13 = scalar_select %p12, %s11, 1
    %s14 = smul.addr %s13, 8
    %s15 = scalar_lea.vmem %s0, %s14
    %s16 = sadd.s32 0, 0
    %p17 = scmp.lt.s32.totalorder %s16, 0
    %s18 = scalar_select %p17, %s16, 0
    %s19 = smul.u32 2, %s18
  $region5: #{channel_gate1.2} parent=0 // pred_fallthru
    _
  %s20 = sadd.s32 0, 0
  %p21 = scmp.lt.s32.totalorder %s20, 0
  %s22 = scalar_select %p21, %s20, 0
  %s23 = smul.u32 2, %s22
  %p24 = scmp.lt.s32.totalorder %s23, 1
  %s25 = scalar_select %p24, %s23, 1
  %s26 = smul.addr %s25, 8
  %s27 = scalar_lea.vmem %s0, %s26
  %s28 = sadd.s32 0, 0
  %p29 = scmp.lt.s32.totalorder %s28, 0
  %s30 = scalar_select %p29, %s28, 0
  %s31 = smul.u32 2, %s30
  %p32 = scmp.lt.s32.totalorder %s31, 1
  %s33 = scalar_select %p32, %s31, 1
  %s34 = smul.addr %s33, 8
  %s35 = scalar_lea.vmem %s0, %s34
  %s36 = sadd.s32 0, 0
  %p37 = scmp.lt.s32.totalorder %s36, 0
  %s38 = scalar_select %p37, %s36, 0
  %s39 = smul.u32 2, %s38
  %p40 = scmp.eq.s32.totalorder 0, 0
  // Predicated region
  $region6: #{channel_gate1.2} parent=0 // pred_check
    %p41 = pneg %p40
  $region7: #{channel_gate1.2} parent=0 // pred_check_branch
    %43 = sbr.rel (%p41) target = $region9
  $region8: #{channel_gate1.2} parent=0 // pred_region
    %vm44 = vcmask 7168
    %45 = vst.msk [vmem:[%s1] sm:$0xff] %vm44, 0.0
  $region9: #{channel_gate1.2} parent=0 // pred_fallthru
    _
  %v46 = vld [vmem:[%s35] sm:$0xff]
  %v47 = vld [vmem:[%s35 + $0x8] sm:$0xff]
  %v48 = vld [vmem:[%s1] sm:$0xff]
  %v49 = vadd.f32 %v46, %v47
  %50 = vadd.xlane.f32.xlu0 %v49
  %v51 = vpop.xlane.xlu0 %50
  %v52 = vadd.f32 %v48, %v51
  %vm53 = vcmask 7168
  %54 = vst.msk [vmem:[%s1] sm:$0xff] %vm53, %v52
  // Predicated region
  $region10: #{channel_gate1.2} parent=0 // pred_check
    _
  $region11: #{channel_gate1.2} parent=0 // pred_check_branch
    %56 = sbr.rel (0) target = $region13
  $region12: #{channel_gate1.2} parent=0 // pred_region
    _
  $region13: #{channel_gate1.2} parent=0 // pred_fallthru
    _
  // Predicated region
  $region14: #{channel_gate1.2} parent=0 // pred_check
    _
  $region15: #{channel_gate1.2} parent=0 // pred_check_branch
    %58 = sbr.rel (0) target = $region17
  $region16: #{channel_gate1.2} parent=0 // pred_region
    _
  $region17: #{channel_gate1.2} parent=0 // pred_fallthru
    _

// kernel: channel_gate1.3
$region0: #{channel_gate1.3}
  #allocation0 [shape = 'u32[]', space=smem, size = 0x4, offset = 0x4, fixed_abs, tag = 'smem constant byte address 0x4 - core index']
  #allocation1 [shape = 'u32[144,128]{1,0:T(1,128)}', space=vmem, size = 0x12000, scoped, tag = 'internal scratch']
  %s0 = inlined_call_operand.vmem [shape: f32[8,1], index: 0, kind: input, shape index: {}]
  %s1 = inlined_call_operand.vmem [shape: f32[8,256], index: 1, kind: output, shape index: {}]
  %s2 = sld [smem:[#allocation0]]
  $region14: #{channel_gate1.3} parent=0
    _
  %s4 = ssub.s32 1, %s2
  %s5 = scalar_select 0, %s4, %s2
  // Predicated region
  $region2: #{channel_gate1.3} parent=0 // pred_check
    _
  $region3: #{channel_gate1.3} parent=0 // pred_check_branch
    %7 = sbr.rel (0) target = $region5
  $region4: #{channel_gate1.3} parent=0 // pred_region
    _
  $region5: #{channel_gate1.3} parent=0 // pred_fallthru
    _
  %v8 = vld [vmem:[%s0] sm:$0xff]
  %10 = vset.pattern.permute.xlu0 0
  %11 = vperm.xlu0 %10, %v8
  %v12 = vpop.permute.xlu0 %11
  %14 = vst [vmem:[%s1] sm:$0xff] %v12
  %15 = vst [vmem:[%s1 + $0x8] sm:$0xff] %v12
  // Predicated region
  $region6: #{channel_gate1.3} parent=0 // pred_check
    _
  $region7: #{channel_gate1.3} parent=0 // pred_check_branch
    %17 = sbr.rel (0) target = $region9
  $region8: #{channel_gate1.3} parent=0 // pred_region
    _
  $region9: #{channel_gate1.3} parent=0 // pred_fallthru
    _
  // Predicated region
  $region10: #{channel_gate1.3} parent=0 // pred_check
    _
  $region11: #{channel_gate1.3} parent=0 // pred_check_branch
    %19 = sbr.rel (0) target = $region13
  $region12: #{channel_gate1.3} parent=0 // pred_region
    _
  $region13: #{channel_gate1.3} parent=0 // pred_fallthru
    _

</llo_original>
